<compile_context>
chip_gen: v6e
topology: v6e:2x2x1
jax: 0.10.0
libtpu: 0.0.40
codegen_flags: <defaults>
</compile_context>

<pallas_src>
import functools

import jax
import jax.numpy as jnp
from jax import lax
from jax.experimental import pallas as pl
from jax.experimental.pallas import tpu as pltpu


def _gated_conv_kernel(x_ref, ht_ref, hb_ref, w_ref, b_ref, o_ref, *,
                       spatial_w, pad, width, fold_taps):
    """One (batch, H-tile) grid step.

    x_ref : (1, C, T)        bulk tile (x.dtype), T = block_h * W lanes
    ht_ref: (1, 1, C, lead)  top halo, right-aligned in a 128-multiple strip
    hb_ref: (1, 1, C, pw)    bottom halo (pw = pad * W lanes)
    w_ref : (2C, width*C) if fold_taps else (width, 2C, C), compute dtype
    b_ref : (2C, 1) f32
    o_ref : (1, C, T) in the output dtype (== x.dtype)
    """
    c = x_ref.shape[1]
    t = o_ref.shape[2]
    pw = pad * spatial_w
    lead = ht_ref.shape[3]                       # multiple of 128, >= pw
    cdt = w_ref.dtype

    bulk = x_ref[0].astype(cdt)                  # (C, T)   cast in-register
    top = ht_ref[0, 0].astype(cdt)               # (C, lead)
    bot = hb_ref[0, 0].astype(cdt)               # (C, pw)

    # Haloed window: [zeros | top halo | bulk | bottom halo]; every non-final
    # concat operand is a multiple of 128 lanes, so boundaries stay aligned.
    xw = jnp.concatenate([top, bulk, bot], axis=-1)   # (C, lead + T + pw)
    off0 = lead - pw                              # lane where the true window starts

    if fold_taps:
        # Small-C path: fold the taps into the contraction -> one big matmul.
        xs = jnp.concatenate(
            [xw[:, off0 + kh * spatial_w: off0 + kh * spatial_w + t]
             for kh in range(width)], axis=0)     # (width*C, T)
        acc = jnp.dot(w_ref[...], xs, preferred_element_type=jnp.float32)
    else:
        # One fused (2C, C) @ (C, T) per tap; contiguous accumulation chain.
        acc = jnp.zeros((2 * c, t), jnp.float32)
        for kh in range(width):                   # static unroll; width is tiny
            xs = xw[:, off0 + kh * spatial_w: off0 + kh * spatial_w + t]
            acc = acc + jnp.dot(w_ref[kh], xs, preferred_element_type=jnp.float32)

    # f32 epilogue (v5e has no bf16 VPU/EUP): bias + GLU gating.
    y = acc + b_ref[...]                          # (2C, T)
    o_ref[0] = (y[:c] * jax.nn.sigmoid(y[c:])).astype(o_ref.dtype)


def _pick_block_h(H, W, max_lanes):
    """Largest proper divisor t of H with (t*W) % 128 == 0 and t*W <= max_lanes;
    falls back to the full extent H (always legal as a single tile)."""
    best = None
    for t in range(1, H):
        if H % t == 0 and (t * W) % 128 == 0 and t * W <= max_lanes:
            best = t
    return best if best is not None else H


def gated_conv(x, weight, bias, *, width, block_h=None,
               compute_dtype=jnp.bfloat16, target_lanes=2048,
               fold_threshold=128):
    """x: (N, C, H, W) NCHW.  weight: (2C, C, width, 1).  bias: (2C,).

    Matches GatedConv.forward in eval mode:
        y = conv2d(x, weight, bias, padding=(width//2, 0))
        out, gate = split(y, C, axis=1);  return out * sigmoid(gate)

    MXU operands use `compute_dtype` (default bf16; pass jnp.float32 for exact
    matmul precision); accumulation and the GLU epilogue stay in f32.  Output
    dtype == x.dtype.
    """
    N, C, H, W = x.shape
    OC = weight.shape[0]
    assert OC == 2 * C, "weight must map C -> 2C channels"
    assert width % 2 == 1 and width >= 3, "odd conv width >= 3 expected"
    assert C % 8 == 0, "C must be a multiple of 8 (fused value/gate sublane split)"
    pad = width // 2

    cdt = jnp.dtype(compute_dtype)
    c_isz = cdt.itemsize
    x_isz = x.dtype.itemsize
    sub_gran = 8 * (4 // max(c_isz, 1))          # native sublane tile: 8 f32 / 16 bf16
    fold = (C <= fold_threshold) and (C % sub_gran == 0)

    # ---- tile selection: largest lane-dense tile under lane target + VMEM cap ----
    bytes_per_lane = (2 * 2 * C * x_isz                              # in/out blocks, double-buffered
                      + C * c_isz * (1 + (width if fold else 0))     # xw (+ folded RHS) live values
                      + 3 * 2 * C * 4)                               # f32 acc + epilogue temps
    vmem_budget = 40 * 1024 * 1024                                   # fits v7x's 64 MiB VMEM
    max_lanes = int(max(128, min(target_lanes, vmem_budget // bytes_per_lane)))
    if block_h is None:
        block_h = _pick_block_h(H, W, max_lanes)
    assert H % block_h == 0 and block_h >= pad, "invalid block_h for this (H, width)"
    num_t = H // block_h

    t_out = block_h * W
    assert num_t == 1 or t_out % 128 == 0
    lane_pad = ((-t_out) % 128) if num_t == 1 else 0   # rare single-tile fallback
    t_out_p = t_out + lane_pad
    pw = pad * W
    lead = -(-pw // 128) * 128                         # top halo strip, 128-aligned width

    # ---- host-side glue (no full copy of x): flatten spatial dims into lanes and
    # cut tiny per-tile halo strips (only 2*pad rows per tile). ----
    x_flat = x.reshape(N, C, H * W)
    if lane_pad:
        x_flat = jnp.pad(x_flat, ((0, 0), (0, 0), (0, lane_pad)))

    zeros_h = jnp.zeros((N, C, pad, W), x.dtype)
    tops = [zeros_h if j == 0 else
            lax.slice_in_dim(x, j * block_h - pad, j * block_h, axis=2)
            for j in range(num_t)]
    bots = [zeros_h if j == num_t - 1 else
            lax.slice_in_dim(x, (j + 1) * block_h, (j + 1) * block_h + pad, axis=2)
            for j in range(num_t)]
    halo_top = jnp.stack(tops, axis=1).reshape(N, num_t, C, pw)
    halo_top = jnp.pad(halo_top, ((0, 0), (0, 0), (0, 0), (lead - pw, 0)))
    halo_bot = jnp.stack(bots, axis=1).reshape(N, num_t, C, pw)

    # ---- fused value+gate weights, per-tap or tap-folded layout ----
    w_taps = weight.reshape(OC, C, width)              # (oc, ci, kh); trailing 1 squeezed
    if fold:
        w_in = jnp.transpose(w_taps, (0, 2, 1)).reshape(OC, width * C).astype(cdt)
    else:
        w_in = jnp.transpose(w_taps, (2, 0, 1)).astype(cdt)     # (width, 2C, C)
    b_in = bias.reshape(OC, 1).astype(jnp.float32)

    # ---- VMEM limit from the actual buffers + advisory cost for XLA ----
    est = (2 * (2 * C * t_out_p * x_isz                 # x + out blocks (double-buffered)
                + C * (lead + pw) * x_isz               # halo blocks
                + w_in.size * c_isz + OC * 4)           # weights + bias
           + C * (lead + t_out_p + pw) * c_isz          # xw live value
           + (width * C * t_out_p * c_isz if fold else 0)
           + 3 * OC * t_out_p * 4)                      # f32 acc + epilogue temps
    vmem_limit = int(min(max(2 * est, 24 * 1024 * 1024), 56 * 1024 * 1024))

    cost = pl.CostEstimate(
        flops=2 * OC * C * width * N * H * W,
        transcendentals=N * C * H * W,
        bytes_accessed=(x_flat.size * x_isz + halo_top.size * x_isz
                        + halo_bot.size * x_isz + w_in.size * c_isz
                        + b_in.size * 4 + N * C * H * W * x_isz))

    w_ndim = w_in.ndim
    out = pl.pallas_call(
        functools.partial(_gated_conv_kernel, spatial_w=W, pad=pad, width=width,
                          fold_taps=fold),
        out_shape=jax.ShapeDtypeStruct((N, C, num_t * t_out_p), x.dtype),
        grid_spec=pltpu.PrefetchScalarGridSpec(
            num_scalar_prefetch=0,
            grid=(N, num_t),
            in_specs=[
                pl.BlockSpec((1, C, t_out_p), lambda n, j: (n, 0, j)),
                pl.BlockSpec((1, 1, C, lead), lambda n, j: (n, j, 0, 0)),
                pl.BlockSpec((1, 1, C, pw), lambda n, j: (n, j, 0, 0)),
                pl.BlockSpec(w_in.shape, lambda n, j: (0,) * w_ndim),
                pl.BlockSpec((OC, 1), lambda n, j: (0, 0)),
            ],
            out_specs=pl.BlockSpec((1, C, t_out_p), lambda n, j: (n, 0, j)),
        ),
        compiler_params=pltpu.CompilerParams(
            dimension_semantics=("parallel", "parallel"),
            vmem_limit_bytes=vmem_limit,
        ),
        cost_estimate=cost,
    )(x_flat, halo_top, halo_bot, w_in, b_in)

    if lane_pad:
        out = out[:, :, :H * W]
    return out.reshape(N, C, H, W)


def make_params(key, input_size, width=3, dropout=0.2):
    """Deterministic parameter init mirroring GatedConv.__init__ semantics."""
    C, OC = input_size, 2 * input_size
    k_v, k_g, k_b = jax.random.split(key, 3)

    # xavier_uniform with gain = sqrt(4 * (1 - dropout))
    gain = (4.0 * (1.0 - dropout)) ** 0.5
    fan_in = C * width * 1
    fan_out = OC * width * 1
    bound = gain * (6.0 / (fan_in + fan_out)) ** 0.5
    v = jax.random.uniform(k_v, (OC, C, width, 1), jnp.float32, -bound, bound)

    # weight-norm reparam: weight = g * v / ||v||  (norm over dims 1,2,3)
    g = jax.random.uniform(k_g, (OC,), jnp.float32, 0.5, 1.5)
    v_norm = jnp.sqrt(jnp.sum(v * v, axis=(1, 2, 3)))
    weight = (g / v_norm)[:, None, None, None] * v

    bias = jax.random.uniform(k_b, (OC,), jnp.float32, -0.1, 0.1)
    return weight, bias


def reference_gated_conv(x, weight, bias, *, width):
    """Pure-JAX reference (lax conv) for correctness checking."""
    pad = width // 2
    y = lax.conv_general_dilated(
        x, weight, window_strides=(1, 1),
        padding=((pad, pad), (0, 0)),
        dimension_numbers=("NCHW", "OIHW", "NCHW"))
    y = y + bias[None, :, None, None]
    C = x.shape[1]
    out, gate = y[:, :C], y[:, C:]
    return out * jax.nn.sigmoid(gate)


if __name__ == "__main__":
    key = jax.random.PRNGKey(0)
    k1, k2, k3, k4, k5, k6, k7, k8 = jax.random.split(key, 8)
    width = 3

    # Case 1: NCHW toy shape, f32 MXU operands (tap-folded small-C path, 2 H-tiles).
    N, C, H, W = 2, 8, 16, 16
    x = jax.random.normal(k1, (N, C, H, W), jnp.float32)
    weight, bias = make_params(k2, C, width=width, dropout=0.2)
    ref = reference_gated_conv(x, weight, bias, width=width)
    out = jax.block_until_ready(
        gated_conv(x, weight, bias, width=width, compute_dtype=jnp.float32))
    assert out.shape == (N, C, H, W)
    assert jnp.allclose(out, ref, atol=1e-4, rtol=1e-4), "case1 f32 mismatch"

    # Case 2: same problem, default bf16 MXU operands (f32 accumulate + epilogue).
    out_bf = jax.block_until_ready(gated_conv(x, weight, bias, width=width))
    assert jnp.allclose(out_bf, ref, atol=5e-2, rtol=5e-2), "case2 bf16 mismatch"

    # Case 3: NMT-style layout (W == 1, conv over sequence length), folded path.
    N2, C2, H2, W2 = 2, 8, 256, 1
    x2 = jax.random.normal(k3, (N2, C2, H2, W2), jnp.float32)
    w2, b2 = make_params(k4, C2, width=width)
    out2 = jax.block_until_ready(
        gated_conv(x2, w2, b2, width=width, compute_dtype=jnp.float32))
    ref2 = reference_gated_conv(x2, w2, b2, width=width)
    assert jnp.allclose(out2, ref2, atol=1e-4, rtol=1e-4), "case3 seq mismatch"

    # Case 4: large-C path (per-tap fused dots), single spatial tile, zero halos.
    N3, C3, H3, W3 = 1, 256, 8, 16
    x3 = jax.random.normal(k5, (N3, C3, H3, W3), jnp.float32)
    w3, b3 = make_params(k6, C3, width=width)
    out3 = jax.block_until_ready(
        gated_conv(x3, w3, b3, width=width, compute_dtype=jnp.float32))
    ref3 = reference_gated_conv(x3, w3, b3, width=width)
    assert jnp.allclose(out3, ref3, atol=1e-4, rtol=1e-4), "case4 large-C mismatch"

    # Case 5: bf16 folded path (C multiple of 16).
    N4, C4, H4, W4 = 2, 16, 16, 16
    x4 = jax.random.normal(k7, (N4, C4, H4, W4), jnp.float32)
    w4, b4 = make_params(k8, C4, width=width)
    out4 = jax.block_until_ready(gated_conv(x4, w4, b4, width=width))
    ref4 = reference_gated_conv(x4, w4, b4, width=width)
    assert jnp.allclose(out4, ref4, atol=5e-2, rtol=5e-2), "case5 bf16-fold mismatch"

    print("KERNEL_OK")
</pallas_src>

<mosaic_0001>
module attributes {stable_mosaic.version = 11 : i64} {
  func.func @_gated_conv_kernel(%arg0: i32, %arg1: i32, %arg2: memref<1x8x128xf32, #tpu.memory_space<vmem>>, %arg3: memref<1x1x8x128xf32, #tpu.memory_space<vmem>>, %arg4: memref<1x1x8x16xf32, #tpu.memory_space<vmem>>, %arg5: memref<16x24xf32, #tpu.memory_space<vmem>>, %arg6: memref<16x1xf32, #tpu.memory_space<vmem>>, %arg7: memref<1x8x128xf32, #tpu.memory_space<vmem>>) attributes {dimension_semantics = [#tpu.dimension_semantics<parallel>, #tpu.dimension_semantics<parallel>], iteration_bounds = array<i64: 2, 2>, scalar_prefetch = 0 : i64, scratch_operands = 0 : i64, tpu.core_type = #tpu.core_type<tc>, window_params = [{transform_indices = @transform_0, window_bounds = array<i64: 1, 8, 128>}, {transform_indices = @transform_1, window_bounds = array<i64: 1, 1, 8, 128>}, {transform_indices = @transform_2, window_bounds = array<i64: 1, 1, 8, 16>}, {pipeline_mode = #tpu.pipeline_mode<synchronous>, transform_indices = @transform_3, window_bounds = array<i64: 16, 24>}, {pipeline_mode = #tpu.pipeline_mode<synchronous>, transform_indices = @transform_4, window_bounds = array<i64: 16, 1>}, {transform_indices = @transform_5, window_bounds = array<i64: 1, 8, 128>}]} {
    %c0 = arith.constant 0 : index
    %c0_0 = arith.constant 0 : index
    %c0_1 = arith.constant 0 : index
    %0 = vector.load %arg2[%c0, %c0_0, %c0_1] : memref<1x8x128xf32, #tpu.memory_space<vmem>>, vector<1x8x128xf32>
    %1 = vector.shape_cast %0 : vector<1x8x128xf32> to vector<8x128xf32>
    %c0_2 = arith.constant 0 : index
    %c0_3 = arith.constant 0 : index
    %c0_4 = arith.constant 0 : index
    %c0_5 = arith.constant 0 : index
    %2 = vector.load %arg3[%c0_2, %c0_3, %c0_4, %c0_5] : memref<1x1x8x128xf32, #tpu.memory_space<vmem>>, vector<1x1x8x128xf32>
    %3 = vector.shape_cast %2 : vector<1x1x8x128xf32> to vector<8x128xf32>
    %c0_6 = arith.constant 0 : index
    %c0_7 = arith.constant 0 : index
    %c0_8 = arith.constant 0 : index
    %c0_9 = arith.constant 0 : index
    %4 = vector.load %arg4[%c0_6, %c0_7, %c0_8, %c0_9] : memref<1x1x8x16xf32, #tpu.memory_space<vmem>>, vector<1x1x8x16xf32>
    %5 = vector.shape_cast %4 : vector<1x1x8x16xf32> to vector<8x16xf32>
    %6 = tpu.concatenate %3, %1, %5 in 1 : vector<8x128xf32>, vector<8x128xf32>, vector<8x16xf32> -> vector<8x272xf32>
    %7 = vector.extract_strided_slice %6 {offsets = [0, 112], sizes = [8, 128], strides = [1, 1]} : vector<8x272xf32> to vector<8x128xf32>
    %8 = vector.extract_strided_slice %6 {offsets = [0, 128], sizes = [8, 128], strides = [1, 1]} : vector<8x272xf32> to vector<8x128xf32>
    %9 = vector.extract_strided_slice %6 {offsets = [0, 144], sizes = [8, 128], strides = [1, 1]} : vector<8x272xf32> to vector<8x128xf32>
    %10 = tpu.concatenate %7, %8, %9 in 0 : vector<8x128xf32>, vector<8x128xf32>, vector<8x128xf32> -> vector<24x128xf32>
    %c0_10 = arith.constant 0 : index
    %c0_11 = arith.constant 0 : index
    %11 = vector.load %arg5[%c0_10, %c0_11] : memref<16x24xf32, #tpu.memory_space<vmem>>, vector<16x24xf32>
    %cst = arith.constant dense<0.000000e+00> : vector<16x128xf32>
    %12 = tpu.matmul %11, %10, %cst {dimension_numbers = #tpu.dot_dimension_numbers<[1], [0], [0], [1], [0, 0, 1, 1], [], []>} : vector<16x24xf32>, vector<24x128xf32>, vector<16x128xf32> -> vector<16x128xf32>
    %c0_12 = arith.constant 0 : index
    %c0_13 = arith.constant 0 : index
    %13 = vector.load %arg6[%c0_12, %c0_13] : memref<16x1xf32, #tpu.memory_space<vmem>>, vector<16x1xf32>
    %14 = vector.broadcast %13 : vector<16x1xf32> to vector<16x128xf32>
    %15 = arith.addf %12, %14 : vector<16x128xf32>
    %16 = vector.extract_strided_slice %15 {offsets = [0, 0], sizes = [8, 128], strides = [1, 1]} : vector<16x128xf32> to vector<8x128xf32>
    %17 = vector.extract_strided_slice %15 {offsets = [8, 0], sizes = [8, 128], strides = [1, 1]} : vector<16x128xf32> to vector<8x128xf32>
    %18 = arith.negf %17 : vector<8x128xf32>
    %19 = math.exp %18 : vector<8x128xf32>
    %cst_14 = arith.constant 1.000000e+00 : f32
    %20 = vector.broadcast %cst_14 : f32 to vector<8x128xf32>
    %21 = arith.addf %20, %19 : vector<8x128xf32>
    %22 = arith.divf %20, %21 : vector<8x128xf32>
    %23 = arith.mulf %16, %22 : vector<8x128xf32>
    %c0_15 = arith.constant 0 : index
    %c0_16 = arith.constant 0 : index
    %c0_17 = arith.constant 0 : index
    %24 = vector.load %arg7[%c0_15, %c0_16, %c0_17] : memref<1x8x128xf32, #tpu.memory_space<vmem>>, vector<1x8x128xf32>
    %25 = vector.shape_cast %24 : vector<1x8x128xf32> to vector<8x128xf32>
    %26 = vector.shape_cast %23 : vector<8x128xf32> to vector<1x8x128xf32>
    tpu.vector_store %arg7[%c0_15, %c0_16, %c0_17], %26 {strides = array<i32>} : memref<1x8x128xf32, #tpu.memory_space<vmem>>, vector<1x8x128xf32>,
    return
  }
  func.func @transform_0(%arg0: i32, %arg1: i32) -> (i32, i32, i32) {
    %c0_i32 = arith.constant 0 : i32
    %c0_i32_0 = arith.constant 0 : i32
    return %arg0, %c0_i32, %arg1 : i32, i32, i32
  }
  func.func @transform_1(%arg0: i32, %arg1: i32) -> (i32, i32, i32, i32) {
    %c0_i32 = arith.constant 0 : i32
    %c0_i32_0 = arith.constant 0 : i32
    %c0_i32_1 = arith.constant 0 : i32
    return %arg0, %arg1, %c0_i32, %c0_i32_0 : i32, i32, i32, i32
  }
  func.func @transform_2(%arg0: i32, %arg1: i32) -> (i32, i32, i32, i32) {
    %c0_i32 = arith.constant 0 : i32
    %c0_i32_0 = arith.constant 0 : i32
    %c0_i32_1 = arith.constant 0 : i32
    return %arg0, %arg1, %c0_i32, %c0_i32_0 : i32, i32, i32, i32
  }
  func.func @transform_3(%arg0: i32, %arg1: i32) -> (i32, i32) {
    %c0_i32 = arith.constant 0 : i32
    %c0_i32_0 = arith.constant 0 : i32
    %c0_i32_1 = arith.constant 0 : i32
    return %c0_i32, %c0_i32_0 : i32, i32
  }
  func.func @transform_4(%arg0: i32, %arg1: i32) -> (i32, i32) {
    %c0_i32 = arith.constant 0 : i32
    %c0_i32_0 = arith.constant 0 : i32
    %c0_i32_1 = arith.constant 0 : i32
    return %c0_i32, %c0_i32_0 : i32, i32
  }
  func.func @transform_5(%arg0: i32, %arg1: i32) -> (i32, i32, i32) {
    %c0_i32 = arith.constant 0 : i32
    %c0_i32_0 = arith.constant 0 : i32
    return %arg0, %c0_i32, %arg1 : i32, i32, i32
  }
}

</mosaic_0001>

<llo_original>
// kernel: tpu_custom_call.1
$region0: #{tpu_custom_call.1}
  #allocation0 [shape = 'u32[]', space=smem, size = 0x4, offset = 0x4, fixed_abs, tag = 'smem constant byte address 0x4 - core index']
  #allocation1 [shape = 'u32[144,128]{1,0:T(1,128)}', space=vmem, size = 0x12000, scoped, tag = 'internal scratch']
  %s0 = inlined_call_operand.hbm [shape: f32[2,8,256], index: 0, kind: input, shape index: {}]
  %s1 = inlined_call_operand.hbm [shape: f32[2,2,8,128], index: 1, kind: input, shape index: {}]
  %s2 = inlined_call_operand.hbm [shape: f32[2,2,8,16], index: 2, kind: input, shape index: {}]
  %s3 = inlined_call_operand.vmem [shape: f32[16,24], index: 3, kind: input, shape index: {}]
  %s4 = inlined_call_operand.vmem [shape: f32[16,1], index: 4, kind: input, shape index: {}]
  %s5 = inlined_call_operand.hbm [shape: f32[2,8,256], index: 5, kind: output, shape index: {}]
  %s6 = sld [smem:[#allocation0]]
  $region65: #{tpu_custom_call.1} parent=0
    _
  %s8 = ssub.s32 1, %s6
  %s9 = scalar_select 0, %s8, %s6
  $region1: #{tpu_custom_call.1} parent=0
    #allocation2 [shape = 'u8[8192]{0}', space=vmem, size = 0x2000, scoped, tag = 'input window, operand 0']
    #allocation3 [shape = 's32[2]{0}', space=sflag, size = 0x8, scoped, tag = 'scoped memory for tpu_custom_call.1']
    #allocation4 [shape = 's32[2]{0}', space=sflag, size = 0x8, scoped, tag = 'scoped memory for tpu_custom_call.1']
    #allocation5 [shape = 'u8[8192]{0}', space=vmem, size = 0x2000, scoped, tag = 'input window, operand 1']
    #allocation6 [shape = 's32[2]{0}', space=sflag, size = 0x8, scoped, tag = 'scoped memory for tpu_custom_call.1']
    #allocation7 [shape = 'u8[8192]{0}', space=vmem, size = 0x2000, scoped, tag = 'input window, operand 2']
    #allocation8 [shape = 'u8[8192]{0}', space=vmem, size = 0x2000, scoped, tag = 'output window, operand 0']
    %10 = vsyncpa [#allocation3], 0
    %s11 = scalar_lea.sflag [#allocation3], 1
    %12 = vsyncpa %s11, 0
    %13 = vsyncpa [#allocation6], 0
    %s14 = scalar_lea.sflag [#allocation6], 1
    %15 = vsyncpa %s14, 0
    %16 = vsyncpa [#allocation4], 0
    %s17 = scalar_lea.sflag [#allocation4], 1
    %18 = vsyncpa %s17, 0
    loop: start=0, step=1, limit=6
    $region2: #{tpu_custom_call.1} parent=1 // loop_pre_header
      _
    $region3: #{tpu_custom_call.1} parent=1 // loop_header
      %s20 = sphi 0, %s24
      %p21 = scmp.ge.s32.totalorder %s20, 6
      %s27 = sphi 0, %s39
      %s28 = sphi 0, %s35
      %s29 = sphi 0, %s27
      %s30 = sphi 0, %s28
      %s31 = sphi 0, %s29
      %s32 = sphi 0, %s30
      %s44 = sphi 0, %s46
      %s47 = sphi 0, %s44
      %s48 = sphi 0, %s47
      %s64 = sphi 0, %s48
      %s72 = sphi 0, %s74
      %s75 = sphi 0, %s72
      %s76 = sphi 0, %s75
      %s92 = sphi 0, %s76
      %s100 = sphi 0, %s102
      %s103 = sphi 0, %s100
      %s104 = sphi 0, %s103
      %s120 = sphi 0, %s104
      %s124 = sphi 0, %s124
      %s126 = sphi 0, %s124
      %s127 = sphi 0, %s126
      %s141 = sphi 0, %s127
      %s145 = sphi 0, %s145
      %s147 = sphi 0, %s145
      %s148 = sphi 0, %s147
      %s162 = sphi 0, %s148
      %s170 = sphi 0, %s172
      %s173 = sphi 0, %s170
      %s174 = sphi 0, %s173
      %s190 = sphi 0, %s174
    $region4: #{tpu_custom_call.1} parent=1 // loop_header_branch
      %23 = sbr.rel (%p21) target = $region8
    $region5: #{tpu_custom_call.1} parent=1 // loop_body
      %s25 = ssub.s32 %s20, 1
      %s26 = ssub.s32 %s20, 2
      %s33 = sadd.s32 1, %s28
      %p34 = scmp.ge.s32.totalorder %s33, 2
      %s35 = scalar_select %p34, 0, %s33
      %s36 = sadd.s32 1, %s27
      %s37 = scalar_select %p34, %s36, %s27
      %p38 = scmp.ge.s32.totalorder %s37, 2
      %s39 = scalar_select %p38, 0, %s37
      %s40 = ssub.s32 %s27, %s39
      %s41 = ssub.s32 %s28, %s35
      %s42 = sor.u32 %s40, %s41
      %p43 = scmp.eq.s32.totalorder %s42, 0
      %s45 = sadd.s32 %s44, 1
      %s46 = scalar_select %p43, %s44, %s45
      %p49 = pneg %p43
      %p50 = scmp.eq.s32.totalorder %s20, 3
      %p51 = por %p49, %p50
      %p52 = scmp.ne.s32.totalorder %s44, %s47
      %p53 = scmp.eq.s32.totalorder %s20, 0
      %p54 = por %p52, %p53
      %p55 = scmp.ne.s32.totalorder %s44, %s47
      %p56 = scmp.eq.s32.totalorder %s25, 3
      %p57 = por %p55, %p56
      %p58 = scmp.ne.s32.totalorder %s47, %s48
      %p59 = scmp.eq.s32.totalorder %s25, 0
      %p60 = por %p58, %p59
      %p61 = scmp.ne.s32.totalorder %s47, %s48
      %p62 = scmp.eq.s32.totalorder %s26, 3
      %p63 = por %p61, %p62
      %p65 = scmp.ne.s32.totalorder %s48, %s64
      %p66 = scmp.eq.s32.totalorder %s26, 0
      %p67 = por %p65, %p66
      %s68 = ssub.s32 %s27, %s39
      %s69 = ssub.s32 %s28, %s35
      %s70 = sor.u32 %s68, %s69
      %p71 = scmp.eq.s32.totalorder %s70, 0
      %s73 = sadd.s32 %s72, 1
      %s74 = scalar_select %p71, %s72, %s73
      %p77 = pneg %p71
      %p78 = scmp.eq.s32.totalorder %s20, 3
      %p79 = por %p77, %p78
      %p80 = scmp.ne.s32.totalorder %s72, %s75
      %p81 = scmp.eq.s32.totalorder %s20, 0
      %p82 = por %p80, %p81
      %p83 = scmp.ne.s32.totalorder %s72, %s75
      %p84 = scmp.eq.s32.totalorder %s25, 3
      %p85 = por %p83, %p84
      %p86 = scmp.ne.s32.totalorder %s75, %s76
      %p87 = scmp.eq.s32.totalorder %s25, 0
      %p88 = por %p86, %p87
      %p89 = scmp.ne.s32.totalorder %s75, %s76
      %p90 = scmp.eq.s32.totalorder %s26, 3
      %p91 = por %p89, %p90
      %p93 = scmp.ne.s32.totalorder %s76, %s92
      %p94 = scmp.eq.s32.totalorder %s26, 0
      %p95 = por %p93, %p94
      %s96 = ssub.s32 %s27, %s39
      %s97 = ssub.s32 %s28, %s35
      %s98 = sor.u32 %s96, %s97
      %p99 = scmp.eq.s32.totalorder %s98, 0
      %s101 = sadd.s32 %s100, 1
      %s102 = scalar_select %p99, %s100, %s101
      %p105 = pneg %p99
      %p106 = scmp.eq.s32.totalorder %s20, 3
      %p107 = por %p105, %p106
      %p108 = scmp.ne.s32.totalorder %s100, %s103
      %p109 = scmp.eq.s32.totalorder %s20, 0
      %p110 = por %p108, %p109
      %p111 = scmp.ne.s32.totalorder %s100, %s103
      %p112 = scmp.eq.s32.totalorder %s25, 3
      %p113 = por %p111, %p112
      %p114 = scmp.ne.s32.totalorder %s103, %s104
      %p115 = scmp.eq.s32.totalorder %s25, 0
      %p116 = por %p114, %p115
      %p117 = scmp.ne.s32.totalorder %s103, %s104
      %p118 = scmp.eq.s32.totalorder %s26, 3
      %p119 = por %p117, %p118
      %p121 = scmp.ne.s32.totalorder %s104, %s120
      %p122 = scmp.eq.s32.totalorder %s26, 0
      %p123 = por %p121, %p122
      %s125 = sadd.s32 %s124, 1
      %p128 = scmp.eq.s32.totalorder %s20, 3
      %p129 = scmp.ne.s32.totalorder %s124, %s126
      %p130 = scmp.eq.s32.totalorder %s20, 0
      %p131 = por %p129, %p130
      %p132 = scmp.ne.s32.totalorder %s124, %s126
      %p133 = scmp.eq.s32.totalorder %s25, 3
      %p134 = por %p132, %p133
      %p135 = scmp.ne.s32.totalorder %s126, %s127
      %p136 = scmp.eq.s32.totalorder %s25, 0
      %p137 = por %p135, %p136
      %p138 = scmp.ne.s32.totalorder %s126, %s127
      %p139 = scmp.eq.s32.totalorder %s26, 3
      %p140 = por %p138, %p139
      %p142 = scmp.ne.s32.totalorder %s127, %s141
      %p143 = scmp.eq.s32.totalorder %s26, 0
      %p144 = por %p142, %p143
      %s146 = sadd.s32 %s145, 1
      %p149 = scmp.eq.s32.totalorder %s20, 3
      %p150 = scmp.ne.s32.totalorder %s145, %s147
      %p151 = scmp.eq.s32.totalorder %s20, 0
      %p152 = por %p150, %p151
      %p153 = scmp.ne.s32.totalorder %s145, %s147
      %p154 = scmp.eq.s32.totalorder %s25, 3
      %p155 = por %p153, %p154
      %p156 = scmp.ne.s32.totalorder %s147, %s148
      %p157 = scmp.eq.s32.totalorder %s25, 0
      %p158 = por %p156, %p157
      %p159 = scmp.ne.s32.totalorder %s147, %s148
      %p160 = scmp.eq.s32.totalorder %s26, 3
      %p161 = por %p159, %p160
      %p163 = scmp.ne.s32.totalorder %s148, %s162
      %p164 = scmp.eq.s32.totalorder %s26, 0
      %p165 = por %p163, %p164
      %s166 = ssub.s32 %s27, %s39
      %s167 = ssub.s32 %s28, %s35
      %s168 = sor.u32 %s166, %s167
      %p169 = scmp.eq.s32.totalorder %s168, 0
      %s171 = sadd.s32 %s170, 1
      %s172 = scalar_select %p169, %s170, %s171
      %p175 = pneg %p169
      %p176 = scmp.eq.s32.totalorder %s20, 3
      %p177 = por %p175, %p176
      %p178 = scmp.ne.s32.totalorder %s170, %s173
      %p179 = scmp.eq.s32.totalorder %s20, 0
      %p180 = por %p178, %p179
      %p181 = scmp.ne.s32.totalorder %s170, %s173
      %p182 = scmp.eq.s32.totalorder %s25, 3
      %p183 = por %p181, %p182
      %p184 = scmp.ne.s32.totalorder %s173, %s174
      %p185 = scmp.eq.s32.totalorder %s25, 0
      %p186 = por %p184, %p185
      %p187 = scmp.ne.s32.totalorder %s173, %s174
      %p188 = scmp.eq.s32.totalorder %s26, 3
      %p189 = por %p187, %p188
      %p191 = scmp.ne.s32.totalorder %s174, %s190
      %p192 = scmp.eq.s32.totalorder %s26, 0
      %p193 = por %p191, %p192
      %p194 = scmp.le.s32.totalorder 1, %s20
      %p195 = scmp.lt.s32.totalorder %s20, 5
      %p196 = pnand %p194, %p195
      %p197 = pneg %p196
      // Predicated region
      $region9: #{tpu_custom_call.1} parent=5 // pred_check
        _
      $region10: #{tpu_custom_call.1} parent=5 // pred_check_branch
        %199 = sbr.rel (%p196) target = $region12
      $region11: #{tpu_custom_call.1} parent=5 // pred_region
        %s200 = ssub.s32 %s20, 1
        // Predicated region
        $region13: #{tpu_custom_call.1} parent=11 // pred_check
          %p201 = pneg %p137
        $region14: #{tpu_custom_call.1} parent=11 // pred_check_branch
          %203 = sbr.rel (%p201) target = $region16
        $region15: #{tpu_custom_call.1} parent=11 // pred_region
          _
        $region16: #{tpu_custom_call.1} parent=11 // pred_fallthru
          _
        // Predicated region
        $region17: #{tpu_custom_call.1} parent=11 // pred_check
          %p204 = pneg %p158
        $region18: #{tpu_custom_call.1} parent=11 // pred_check_branch
          %206 = sbr.rel (%p204) target = $region20
        $region19: #{tpu_custom_call.1} parent=11 // pred_region
          _
        $region20: #{tpu_custom_call.1} parent=11 // pred_fallthru
          _
      $region12: #{tpu_custom_call.1} parent=5 // pred_fallthru
        _
      %p207 = scmp.lt.s32.totalorder %s20, 4
      // Predicated region
      $region21: #{tpu_custom_call.1} parent=5 // pred_check
        %p208 = pneg %p207
      $region22: #{tpu_custom_call.1} parent=5 // pred_check_branch
        %210 = sbr.rel (%p208) target = $region24
      $region23: #{tpu_custom_call.1} parent=5 // pred_region
        // Predicated region
        $region25: #{tpu_custom_call.1} parent=23 // pred_check
          %p211 = pneg %p54
        $region26: #{tpu_custom_call.1} parent=23 // pred_check_branch
          %213 = sbr.rel (%p211) target = $region28
        $region27: #{tpu_custom_call.1} parent=23 // pred_region
          %s214 = sand.u32 %s44, 1
          %s215 = scalar_lea.sflag [#allocation3], %s214
          %s216 = sand.u32 %s44, 1
          %s217 = smul.addr %s216, 8
          %s218 = scalar_lea.vmem [#allocation2], %s217
          %s220 = ssub.s32 128, 128
          %221 = vsyncadd %s215, %s220
          %s222 = smul.addr %s27, 2
          %s223 = sadd.s32 %s28, %s222
          %s224 = smul.addr %s223, 128
          %s225 = scalar_lea.hbm %s0, %s224
          %s227 = sshll.u32 %s218, 4
          %s228 = int_to_ptr.vmem [resolvable:$true] %s227
          %230 = dma.hbm_to_vmem [thread:$0]  %s225, 128, %s228, %s215
        $region28: #{tpu_custom_call.1} parent=23 // pred_fallthru
          _
        // Predicated region
        $region29: #{tpu_custom_call.1} parent=23 // pred_check
          %p231 = pneg %p82
        $region30: #{tpu_custom_call.1} parent=23 // pred_check_branch
          %233 = sbr.rel (%p231) target = $region32
        $region31: #{tpu_custom_call.1} parent=23 // pred_region
          %s234 = sand.u32 %s20, 1
          %s235 = scalar_lea.sflag [#allocation6], %s234
          %s236 = sand.u32 %s72, 1
          %s237 = smul.addr %s236, 8
          %s238 = scalar_lea.vmem [#allocation5], %s237
          %s240 = ssub.s32 128, 128
          %241 = vsyncadd %s235, %s240
          %s242 = smul.addr %s27, 2
          %s243 = sadd.s32 %s28, %s242
          %s244 = smul.addr %s243, 128
          %s245 = scalar_lea.hbm %s1, %s244
          %s247 = sshll.u32 %s238, 4
          %s248 = int_to_ptr.vmem [resolvable:$true] %s247
          %250 = dma.hbm_to_vmem [thread:$0]  %s245, 128, %s248, %s235
        $region32: #{tpu_custom_call.1} parent=23 // pred_fallthru
          _
        // Predicated region
        $region33: #{tpu_custom_call.1} parent=23 // pred_check
          %p251 = pneg %p110
        $region34: #{tpu_custom_call.1} parent=23 // pred_check_branch
          %253 = sbr.rel (%p251) target = $region36
        $region35: #{tpu_custom_call.1} parent=23 // pred_region
          %s254 = sand.u32 %s20, 1
          %s255 = scalar_lea.sflag [#allocation6], %s254
          %s256 = sand.u32 %s100, 1
          %s257 = smul.addr %s256, 8
          %s258 = scalar_lea.vmem [#allocation7], %s257
          %s260 = ssub.s32 128, 128
          %261 = vsyncadd %s255, %s260
          %s262 = smul.addr %s27, 2
          %s263 = sadd.s32 %s28, %s262
          %s264 = smul.addr %s263, 128
          %s265 = scalar_lea.hbm %s2, %s264
          %s267 = sshll.u32 %s258, 4
          %s268 = int_to_ptr.vmem [resolvable:$true] %s267
          %270 = dma.hbm_to_vmem [thread:$0]  %s265, 128, %s268, %s255
        $region36: #{tpu_custom_call.1} parent=23 // pred_fallthru
          _
      $region24: #{tpu_custom_call.1} parent=5 // pred_fallthru
        _
      %p271 = scmp.le.s32.totalorder 1, %s20
      %p272 = scmp.lt.s32.totalorder %s20, 5
      %p273 = pnand %p271, %p272
      %p274 = pneg %p273
      // Predicated region
      $region37: #{tpu_custom_call.1} parent=5 // pred_check
        _
      $region38: #{tpu_custom_call.1} parent=5 // pred_check_branch
        %276 = sbr.rel (%p273) target = $region40
      $region39: #{tpu_custom_call.1} parent=5 // pred_region
        %s277 = ssub.s32 %s20, 1
        %s278 = sand.u32 %s47, 1
        %s279 = scalar_lea.sflag [#allocation3], %s278
        %s280 = sand.u32 %s47, 1
        %s281 = smul.addr %s280, 8
        %s282 = scalar_lea.vmem [#allocation2], %s281
        // Predicated region
        $region41: #{tpu_custom_call.1} parent=39 // pred_check
          %p283 = pneg %p60
        $region42: #{tpu_custom_call.1} parent=39 // pred_check_branch
          %285 = sbr.rel (%p283) target = $region44
        $region43: #{tpu_custom_call.1} parent=39 // pred_region
          %286 = dma.done %s279, 128
        $region44: #{tpu_custom_call.1} parent=39 // pred_fallthru
          _
        %s287 = sand.u32 %s25, 1
        %s288 = scalar_lea.sflag [#allocation6], %s287
        %s289 = sand.u32 %s75, 1
        %s290 = smul.addr %s289, 8
        %s291 = scalar_lea.vmem [#allocation5], %s290
        // Predicated region
        $region45: #{tpu_custom_call.1} parent=39 // pred_check
          %p292 = pneg %p88
        $region46: #{tpu_custom_call.1} parent=39 // pred_check_branch
          %294 = sbr.rel (%p292) target = $region48
        $region47: #{tpu_custom_call.1} parent=39 // pred_region
          %295 = dma.done %s288, 128
        $region48: #{tpu_custom_call.1} parent=39 // pred_fallthru
          _
        %s296 = sand.u32 %s25, 1
        %s297 = scalar_lea.sflag [#allocation6], %s296
        %s298 = sand.u32 %s103, 1
        %s299 = smul.addr %s298, 8
        %s300 = scalar_lea.vmem [#allocation7], %s299
        // Predicated region
        $region49: #{tpu_custom_call.1} parent=39 // pred_check
          %p301 = pneg %p116
        $region50: #{tpu_custom_call.1} parent=39 // pred_check_branch
          %303 = sbr.rel (%p301) target = $region52
        $region51: #{tpu_custom_call.1} parent=39 // pred_region
          %304 = dma.done %s297, 128
        $region52: #{tpu_custom_call.1} parent=39 // pred_fallthru
          _
        %s305 = sand.u32 %s47, 1
        %s306 = scalar_lea.sflag [#allocation3], %s305
        %s307 = sand.u32 %s47, 1
        %s308 = smul.addr %s307, 8
        %s309 = scalar_lea.vmem [#allocation2], %s308
        %p310 = pneg %p60
        %p311 = pneg %p57
        %s312 = sand.u32 %s25, 1
        %s313 = scalar_lea.sflag [#allocation6], %s312
        %s314 = sand.u32 %s75, 1
        %s315 = smul.addr %s314, 8
        %s316 = scalar_lea.vmem [#allocation5], %s315
        %p317 = pneg %p88
        %p318 = pneg %p85
        %s319 = sand.u32 %s25, 1
        %s320 = scalar_lea.sflag [#allocation6], %s319
        %s321 = sand.u32 %s103, 1
        %s322 = smul.addr %s321, 8
        %s323 = scalar_lea.vmem [#allocation7], %s322
        %p324 = pneg %p116
        %p325 = pneg %p113
        %p326 = pneg %p137
        %p327 = pneg %p134
        %p328 = pneg %p158
        %p329 = pneg %p155
        %p330 = pneg %p186
        %p331 = pneg %p183
        %s332 = sand.u32 %s173, 1
        %s333 = scalar_lea.sflag [#allocation4], %s332
        %s334 = sand.u32 %s173, 1
        %s335 = smul.addr %s334, 8
        %s336 = scalar_lea.vmem [#allocation8], %s335
        %v337 = vld [vmem:[%s282] sm:$0xff]
        %v338 = vld [vmem:[%s291] sm:$0xff]
        %v339 = vld [vmem:[%s300] sm:$0xff]
        %341 = vrot.lane.b32.xlu0 %v337, 112
        %v342 = vpop.permute.xlu0 %341
        %344 = vrot.lane.b32.xlu0 %v337, 96
        %v345 = vpop.permute.xlu0 %344
        %346 = vrot.lane.b32.xlu0 %v339, 96
        %v347 = vpop.permute.xlu0 %346
        %vm348 = vcmask 785408
        %v349 = vsel %vm348, %v345, %v347
        %v350 = vld [vmem:[%s3] sm:$0xff]
        %v351 = vld [vmem:[%s3 + $0x8] sm:$0xff]
        %v352 = vld [vmem:[%s4] sm:$0xff]
        %v353 = vld [vmem:[%s4 + $0x8] sm:$0xff]
        %355 = vset.pattern.permute.xlu0 0
        %356 = vperm.xlu0 %355, %v352
        %v357 = vpop.permute.xlu0 %356
        %360 = vset.pattern.permute.xlu0 0
        %361 = vperm.xlu0 %360, %v353
        %v362 = vpop.permute.xlu0 %361
        %365 = vrot.lane.b32.xlu0 %v338, 16
        %v366 = vpop.permute.xlu0 %365
        %367 = vrot.lane.b32.xlu0 %v337, 16
        %v368 = vpop.permute.xlu0 %367
        %369 = vrot.lane.b32.xlu0 %v342, 16
        %v370 = vpop.permute.xlu0 %369
        %371 = vrot.lane.b32.xlu0 %v345, 16
        %v372 = vpop.permute.xlu0 %371
        %373 = vrot.lane.b32.xlu0 %v349, 16
        %v374 = vpop.permute.xlu0 %373
        %vm375 = vcmask 130048
        %v376 = vsel %vm375, %v366, %v368
        %v377 = vsel %vm375, %v372, %v374
        %vm381 = vcmask 195584
        %v383 = vsel %vm381, %v350, 0
        %v386 = vsel %vm381, %v351, 0
        %388 = vmatprep.subr.mxu0 0.0
        %389 = vmatpush1.msra.mxu0 0.0
        %390 = vmatprep.subr.mxu0 0.0
        %391 = vmatpush1.msra.mxu0 0.0
        %392 = vmatprep.subr.mxu0 0.0
        %393 = vmatpush1.msra.mxu0 0.0
        %394 = vmatprep.subr.mxu0 0.0
        %395 = vmatpush1.msra.mxu0 0.0
        %396 = vmatprep.subr.mxu0 0.0
        %397 = vmatpush1.msra.mxu0 0.0
        %398 = vmatprep.subr.mxu0 0.0
        %399 = vmatpush1.msra.mxu0 0.0
        %400 = vmatprep.subr.mxu0 0.0
        %401 = vmatpush1.msra.mxu0 0.0
        %402 = vmatprep.subr.mxu0 0.0
        %403 = vmatpush1.msra.mxu0 0.0
        %404 = vmatprep.subr.mxu0 0.0
        %405 = vmatpush1.msra.mxu0 0.0
        %406 = vmatprep.subr.mxu0 0.0
        %407 = vmatpush1.msra.mxu0 0.0
        %408 = vmatprep.subr.mxu0 0.0
        %409 = vmatpush1.msra.mxu0 0.0
        %410 = vmatprep.subr.mxu0 0.0
        %411 = vmatpush1.msra.mxu0 0.0
        %412 = vmatprep.subr.mxu0 0.0
        %413 = vmatpush1.msra.mxu0 0.0
        %414 = vmatprep.subr.mxu0 0.0
        %415 = vmatpush1.msra.mxu0 %v377
        %416 = vmatprep.subr.mxu0 0.0
        %417 = vmatpush1.msra.mxu0 %v370
        %418 = vmatprep.subr.mxu0 0.0
        %419 = vmatpush1.msra.mxu0 %v376
        %420 = vmatprep.subr.mxu0 0.0
        %421 = vmatpush2.msra.mxu0 0.0
        %422 = vmatprep.subr.mxu0 0.0
        %423 = vmatpush2.msra.mxu0 0.0
        %424 = vmatprep.subr.mxu0 0.0
        %425 = vmatpush2.msra.mxu0 0.0
        %426 = vmatprep.subr.mxu0 0.0
        %427 = vmatpush2.msra.mxu0 0.0
        %428 = vmatprep.subr.mxu0 0.0
        %429 = vmatpush2.msra.mxu0 0.0
        %430 = vmatprep.subr.mxu0 0.0
        %431 = vmatpush2.msra.mxu0 0.0
        %432 = vmatprep.subr.mxu0 0.0
        %433 = vmatpush2.msra.mxu0 0.0
        %434 = vmatprep.subr.mxu0 0.0
        %435 = vmatpush2.msra.mxu0 0.0
        %436 = vmatprep.subr.mxu0 0.0
        %437 = vmatpush2.msra.mxu0 0.0
        %438 = vmatprep.subr.mxu0 0.0
        %439 = vmatpush2.msra.mxu0 0.0
        %440 = vmatprep.subr.mxu0 0.0
        %441 = vmatpush2.msra.mxu0 0.0
        %442 = vmatprep.subr.mxu0 0.0
        %443 = vmatpush2.msra.mxu0 0.0
        %444 = vmatprep.subr.mxu0 0.0
        %445 = vmatpush2.msra.mxu0 0.0
        %446 = vmatprep.subr.mxu0 0.0
        %447 = vmatpush2.msra.mxu0 0.0
        %448 = vmatprep.subr.mxu0 0.0
        %449 = vmatpush2.msra.mxu0 0.0
        %450 = vmatprep.subr.mxu0 0.0
        %451 = vmatpush2.msra.mxu0 0.0
        %452 = vmatprep.mubr.f32.mxu0 0.0
        %453 = vmatmul.mubr.f32.gmra.mxu0 %v383
        %v454 = vpop.f32.mrf.mxu0
        %v455 = vadd.f32 %v357, %v454
        %v456 = vpop.f32.mrf.mxu0
        %457 = vmatprep.mubr.f32.mxu0 0.0
        %458 = vmatmul.mubr.f32.gmra.mxu0 %v386
        %v459 = vpop.f32.mrf.mxu0
        %v460 = vadd.f32 %v362, %v459
        %v461 = vpop.f32.mrf.mxu0
        %462 = vdwg.mxu0
        %v463 = vxor.u32 %v460, 2147483648
        %v464 = vmul.f32 %v463, 1.442695
        %v465 = vpow.pop %v464
        %v466 = vadd.f32 %v465, 1.0
        %v467 = vrcp.pop %v466
        %v468 = vmul.f32 1.0, %v467
        %v469 = vmul.f32 %v455, %v468
        %470 = vst [vmem:[%s336] sm:$0xff] %v469
        %s471 = sand.u32 %s173, 1
        %s472 = scalar_lea.sflag [#allocation4], %s471
        %s473 = sand.u32 %s173, 1
        %s474 = smul.addr %s473, 8
        %s475 = scalar_lea.vmem [#allocation8], %s474
        // Predicated region
        $region53: #{tpu_custom_call.1} parent=39 // pred_check
          %p476 = pneg %p183
        $region54: #{tpu_custom_call.1} parent=39 // pred_check_branch
          %478 = sbr.rel (%p476) target = $region56
        $region55: #{tpu_custom_call.1} parent=39 // pred_region
          %s480 = ssub.s32 128, 128
          %481 = vsyncadd %s472, %s480
          %s482 = smul.addr %s29, 2
          %s483 = sadd.s32 %s30, %s482
          %s484 = smul.addr %s483, 128
          %s485 = scalar_lea.hbm %s5, %s484
          %s487 = sshll.u32 %s475, 4
          %s488 = int_to_ptr.vmem [resolvable:$true] %s487
          %490 = dma.vmem_to_hbm [thread:$0]  %s488, 128, %s485, %s472
        $region56: #{tpu_custom_call.1} parent=39 // pred_fallthru
          _
      $region40: #{tpu_custom_call.1} parent=5 // pred_fallthru
        _
      %p491 = scmp.le.s32.totalorder 2, %s20
      // Predicated region
      $region57: #{tpu_custom_call.1} parent=5 // pred_check
        %p492 = pneg %p491
      $region58: #{tpu_custom_call.1} parent=5 // pred_check_branch
        %494 = sbr.rel (%p492) target = $region60
      $region59: #{tpu_custom_call.1} parent=5 // pred_region
        %s495 = ssub.s32 %s20, 2
        // Predicated region
        $region61: #{tpu_custom_call.1} parent=59 // pred_check
          %p496 = pneg %p189
        $region62: #{tpu_custom_call.1} parent=59 // pred_check_branch
          %498 = sbr.rel (%p496) target = $region64
        $region63: #{tpu_custom_call.1} parent=59 // pred_region
          %s499 = sand.u32 %s174, 1
          %s500 = scalar_lea.sflag [#allocation4], %s499
          %s501 = sand.u32 %s174, 1
          %s502 = smul.addr %s501, 8
          %s503 = scalar_lea.vmem [#allocation8], %s502
          %504 = dma.done %s500, 128
        $region64: #{tpu_custom_call.1} parent=59 // pred_fallthru
          _
      $region60: #{tpu_custom_call.1} parent=5 // pred_fallthru
        _
    $region6: #{tpu_custom_call.1} parent=1 // loop_footer
      %s24 = sadd.s32 1, %s20
    $region7: #{tpu_custom_call.1} parent=1 // loop_footer_branch
      %19 = sbr.rel target = $region3
    $region8: #{tpu_custom_call.1} parent=1 // loop_exit
      _
    %505 = vsyncpa [#allocation3], 1
    %s506 = scalar_lea.sflag [#allocation3], 1
    %507 = vsyncpa %s506, 1
    %508 = vsyncpa [#allocation6], 1
    %s509 = scalar_lea.sflag [#allocation6], 1
    %510 = vsyncpa %s509, 1
    %511 = vsyncpa [#allocation4], 1
    %s512 = scalar_lea.sflag [#allocation4], 1
    %513 = vsyncpa %s512, 1

</llo_original>
